<compile_context>
chip_gen: v7x
topology: tpu7x:2x2x1
jax: 0.10.0
libtpu: 0.0.40
codegen_flags: <defaults>
</compile_context>

<pallas_src>
import functools

import jax
import jax.numpy as jnp
from jax import lax
from jax.experimental import pallas as pl
from jax.experimental.pallas import tpu as pltpu


def pnl_kernel(x_h_ref, x_l_ref,
               wt_ref, bt_ref,      # theta 1x1 conv, pre-scaled by 1/n_l
               wgp_ref, bgp_ref,    # stacked [bn_scale*W@g ; phi] conv on x_l
               b_out_ref,           # bn_scale*bw + bn_shift
               out_ref,
               *, reduc_ratio):
    f32 = jnp.float32
    r = reduc_ratio
    xh = x_h_ref[...]                               # (high_dim, S_h), compute dtype
    xl = x_l_ref[...]                               # (low_dim,  S_l), compute dtype
    high_dim = xh.shape[0]
    s_h = xh.shape[-1]
    s_l = xl.shape[-1]
    n_t = s_h // r
    n_l = s_l // r

    # theta 1x1 conv (attention 1/n_l scale already folded into wt/bt).
    theta = jnp.dot(wt_ref[...], xh, preferred_element_type=f32) + bt_ref[...]   # (c_r, S_h)

    # Fused g/phi conv on x_l.  Rows [0, high_dim) carry bn_scale * W applied to
    # g (the "gproj" path); rows [high_dim, high_dim + c_r) are phi.  high_dim is
    # a multiple of 8 here, so both slices are sublane-tile-aligned views.
    gphi = jnp.dot(wgp_ref[...], xl, preferred_element_type=f32) + bgp_ref[...]  # (high_dim+c_r, S_l)
    gproj = gphi[:high_dim, :]                      # (high_dim, S_l)
    phi = gphi[high_dim:, :]                        # (c_r, S_l)

    b_out = b_out_ref[...]                          # (high_dim, 1)

    # Re-associated linear attention.  For output column chunk j:
    #   wy_j = sum_jb (gproj_chunk_j @ phi_chunk_jb^T) @ theta_chunk_jb + b_out
    # The PyTorch .view() permutations on theta/phi/g cancel in this form, so no
    # repacking is needed; every slice below is a static, 128-aligned lane slice.
    for j in range(r):
        gp_j = gproj[:, j * n_l:(j + 1) * n_l]      # (high_dim, n_l)
        wy = None
        for jb in range(r):
            # tiny (high_dim, c_r) intermediate, big-K (K = n_l) contraction
            d = lax.dot_general(gp_j, phi[:, jb * n_l:(jb + 1) * n_l],
                                (((1,), (1,)), ((), ())),
                                preferred_element_type=f32)          # (high_dim, c_r)
            term = jnp.dot(d, theta[:, jb * n_t:(jb + 1) * n_t],
                           preferred_element_type=f32)               # (high_dim, n_t)
            wy = term if wy is None else wy + term
        wy = wy + b_out                                              # bn(W(y)) chunk j
        gate = jax.nn.sigmoid(wy)
        xh_c = xh[:, j * n_t:(j + 1) * n_t].astype(f32)
        # z = gate*wy + (1-gate)*x_h  ==  x_h + gate*(wy - x_h)
        out_ref[:, j * n_t:(j + 1) * n_t] = (xh_c + gate * (wy - xh_c)).astype(out_ref.dtype)


def _const_spec(arr):
    nd = arr.ndim
    return pl.BlockSpec(arr.shape, lambda b, _nd=nd: (0,) * _nd)


def pnl_forward(x_h, x_l, params, *, low_dim, reduc_ratio,
                compute_dtype=jnp.bfloat16):
    wg, bg, wt, bt, wp, bp, ww, bw, bn_scale, bn_shift = params
    B, high_dim, H_h, W_h = x_h.shape
    _, _, H_l, W_l = x_l.shape
    r = reduc_ratio
    s_h = H_h * W_h
    s_l = H_l * W_l
    assert s_h % r == 0 and s_l % r == 0 and low_dim % r == 0
    n_l = s_l // r
    f32 = jnp.float32
    cdt = compute_dtype

    # --- one-time weight folds (tiny matrices, done once for all batches) ---
    inv_nl = jnp.asarray(1.0 / n_l, f32)
    wt_s = (wt.astype(f32) * inv_nl).astype(cdt)            # 1/n_l folded into theta conv
    bt_s = (bt.astype(f32) * inv_nl)                        # bias stays f32
    w_gp = bn_scale * (ww @ wg)                             # (high_dim, low_dim)
    b_gp = bn_scale * (ww @ bg)                             # (high_dim, 1)
    b_out = (bn_scale * bw + bn_shift).astype(f32)          # (high_dim, 1)
    wgp = jnp.concatenate([w_gp, wp], axis=0).astype(cdt)   # (high_dim + c_r, low_dim)
    bgp = jnp.concatenate([b_gp, bp], axis=0).astype(f32)   # (high_dim + c_r, 1)

    # bf16 activations halve HBM traffic; all matmuls accumulate in f32.
    x_h_f = x_h.reshape(B, high_dim, s_h).astype(cdt)
    x_l_f = x_l.reshape(B, low_dim, s_l).astype(cdt)

    kernel = functools.partial(pnl_kernel, reduc_ratio=r)

    out = pl.pallas_call(
        kernel,
        out_shape=jax.ShapeDtypeStruct((B, high_dim, s_h), x_h.dtype),
        grid=(B,),
        in_specs=[
            pl.BlockSpec((pl.Squeezed(), high_dim, s_h), lambda b: (b, 0, 0)),
            pl.BlockSpec((pl.Squeezed(), low_dim, s_l), lambda b: (b, 0, 0)),
            _const_spec(wt_s), _const_spec(bt_s),
            _const_spec(wgp), _const_spec(bgp),
            _const_spec(b_out),
        ],
        out_specs=pl.BlockSpec((pl.Squeezed(), high_dim, s_h), lambda b: (b, 0, 0)),
        compiler_params=pltpu.CompilerParams(
            dimension_semantics=("parallel",),
            vmem_limit_bytes=32 * 1024 * 1024,
        ),
    )(x_h_f, x_l_f, wt_s, bt_s, wgp, bgp, b_out)
    return out.reshape(B, high_dim, H_h, W_h)


def pnl_reference(x_h, x_l, params, *, low_dim, reduc_ratio):
    """Pure-JAX reference mirroring the PyTorch forward exactly (no folds)."""
    wg, bg, wt, bt, wp, bp, ww, bw, bn_scale, bn_shift = params
    B, high_dim, H_h, W_h = x_h.shape
    c_r = low_dim // reduc_ratio
    xhf = x_h.reshape(B, high_dim, -1)
    xlf = x_l.reshape(B, x_l.shape[1], -1)
    g = jnp.einsum('oc,bcs->bos', wg, xlf) + bg[None]
    theta = jnp.einsum('oc,bcs->bos', wt, xhf) + bt[None]
    phi = jnp.einsum('oc,bcs->bos', wp, xlf) + bp[None]
    g_x = g.reshape(B, low_dim, -1).transpose(0, 2, 1)
    theta_x = theta.reshape(B, low_dim, -1).transpose(0, 2, 1)
    phi_x = phi.reshape(B, low_dim, -1)
    energy = jnp.matmul(theta_x, phi_x)
    attention = energy / energy.shape[-1]
    y = jnp.matmul(attention, g_x)
    y = jnp.transpose(y, (0, 2, 1)).reshape(B, c_r, H_h, W_h)
    wy = jnp.einsum('oc,bchw->bohw', ww, y) + bw.reshape(1, high_dim, 1, 1)
    wy = wy * bn_scale.reshape(1, high_dim, 1, 1) + bn_shift.reshape(1, high_dim, 1, 1)
    gate = jax.nn.sigmoid(wy)
    return gate * wy + (1.0 - gate) * x_h


if __name__ == "__main__":
    B, high_dim, low_dim, r = 2, 8, 8, 2
    H_h = W_h = 16
    H_l = W_l = 16
    c_r = low_dim // r
    eps = 1e-5

    key = jax.random.PRNGKey(0)
    ks = jax.random.split(key, 10)
    x_h = jax.random.normal(ks[0], (B, high_dim, H_h, W_h), jnp.float32)
    x_l = jax.random.normal(ks[1], (B, low_dim, H_l, W_l), jnp.float32)

    def uinit(k, shape, fan_in):
        bound = 1.0 / (fan_in ** 0.5)
        return jax.random.uniform(k, shape, jnp.float32, -bound, bound)

    wg = uinit(ks[2], (c_r, low_dim), low_dim)
    bg = uinit(ks[3], (c_r, 1), low_dim)
    wt = uinit(ks[4], (c_r, high_dim), high_dim)
    bt = uinit(ks[5], (c_r, 1), high_dim)
    wp = uinit(ks[6], (c_r, low_dim), low_dim)
    bp = uinit(ks[7], (c_r, 1), low_dim)
    ww = uinit(ks[8], (high_dim, c_r), c_r)
    bw = uinit(ks[9], (high_dim, 1), c_r)

    # BatchNorm2d(high_dim) with gamma=0, beta=0 (as in the module __init__),
    # folded in eval mode (running_mean=0, running_var=1).
    gamma = jnp.zeros((high_dim, 1), jnp.float32)
    beta = jnp.zeros((high_dim, 1), jnp.float32)
    bn_scale = gamma / jnp.sqrt(1.0 + eps)
    bn_shift = beta
    params = (wg, bg, wt, bt, wp, bp, ww, bw, bn_scale, bn_shift)

    # gamma=1 config exercises the full attention / W / BN path (zero-init BN
    # makes that path vanish from the output otherwise).
    bn_scale2 = jnp.ones((high_dim, 1), jnp.float32) / jnp.sqrt(1.0 + eps)
    params2 = (wg, bg, wt, bt, wp, bp, ww, bw, bn_scale2, bn_shift)

    ok = True
    errs = []
    for prm in (params, params2):
        ref = pnl_reference(x_h, x_l, prm, low_dim=low_dim, reduc_ratio=r)

        # f32 compute path: validates the re-associated algorithm tightly.
        out_f32 = pnl_forward(x_h, x_l, prm, low_dim=low_dim, reduc_ratio=r,
                              compute_dtype=jnp.float32)
        jax.block_until_ready(out_f32)
        e32 = float(jnp.max(jnp.abs(out_f32 - ref)))
        ok &= bool(jnp.allclose(out_f32, ref, atol=1e-4, rtol=1e-3))

        # bf16 compute path (the fast/default path): looser tolerance.
        out_bf16 = pnl_forward(x_h, x_l, prm, low_dim=low_dim, reduc_ratio=r,
                               compute_dtype=jnp.bfloat16)
        jax.block_until_ready(out_bf16)
        e16 = float(jnp.max(jnp.abs(out_bf16 - ref)))
        ok &= bool(jnp.allclose(out_bf16, ref, atol=5e-2, rtol=5e-2))
        errs += [e32, e16]

    if ok:
        print("KERNEL_OK")
    else:
        print("MISMATCH", errs)
</pallas_src>

<mosaic_0001>
module attributes {stable_mosaic.version = 11 : i64} {
  func.func @pnl_kernel(%arg0: i32, %arg1: memref<1x8x256xf32, #tpu.memory_space<vmem>>, %arg2: memref<1x8x256xf32, #tpu.memory_space<vmem>>, %arg3: memref<4x8xf32, #tpu.memory_space<vmem>>, %arg4: memref<4x1xf32, #tpu.memory_space<vmem>>, %arg5: memref<12x8xf32, #tpu.memory_space<vmem>>, %arg6: memref<12x1xf32, #tpu.memory_space<vmem>>, %arg7: memref<8x1xf32, #tpu.memory_space<vmem>>, %arg8: memref<1x8x256xf32, #tpu.memory_space<vmem>>) attributes {dimension_semantics = [#tpu.dimension_semantics<parallel>], iteration_bounds = array<i64: 2>, scalar_prefetch = 0 : i64, scratch_operands = 0 : i64, tpu.core_type = #tpu.core_type<tc>, window_params = [{transform_indices = @transform_0, window_bounds = array<i64: 1, 8, 256>}, {transform_indices = @transform_1, window_bounds = array<i64: 1, 8, 256>}, {pipeline_mode = #tpu.pipeline_mode<synchronous>, transform_indices = @transform_2, window_bounds = array<i64: 4, 8>}, {pipeline_mode = #tpu.pipeline_mode<synchronous>, transform_indices = @transform_3, window_bounds = array<i64: 4, 1>}, {pipeline_mode = #tpu.pipeline_mode<synchronous>, transform_indices = @transform_4, window_bounds = array<i64: 12, 8>}, {pipeline_mode = #tpu.pipeline_mode<synchronous>, transform_indices = @transform_5, window_bounds = array<i64: 12, 1>}, {pipeline_mode = #tpu.pipeline_mode<synchronous>, transform_indices = @transform_6, window_bounds = array<i64: 8, 1>}, {transform_indices = @transform_7, window_bounds = array<i64: 1, 8, 256>}]} {
    %c0 = arith.constant 0 : index
    %c0_0 = arith.constant 0 : index
    %c0_1 = arith.constant 0 : index
    %0 = vector.load %arg1[%c0, %c0_0, %c0_1] : memref<1x8x256xf32, #tpu.memory_space<vmem>>, vector<1x8x256xf32>
    %1 = vector.shape_cast %0 : vector<1x8x256xf32> to vector<8x256xf32>
    %c0_2 = arith.constant 0 : index
    %c0_3 = arith.constant 0 : index
    %c0_4 = arith.constant 0 : index
    %2 = vector.load %arg2[%c0_2, %c0_3, %c0_4] : memref<1x8x256xf32, #tpu.memory_space<vmem>>, vector<1x8x256xf32>
    %3 = vector.shape_cast %2 : vector<1x8x256xf32> to vector<8x256xf32>
    %c0_5 = arith.constant 0 : index
    %c0_6 = arith.constant 0 : index
    %4 = vector.load %arg3[%c0_5, %c0_6] : memref<4x8xf32, #tpu.memory_space<vmem>>, vector<4x8xf32>
    %cst = arith.constant dense<0.000000e+00> : vector<4x256xf32>
    %5 = tpu.matmul %4, %1, %cst {dimension_numbers = #tpu.dot_dimension_numbers<[1], [0], [0], [1], [0, 0, 1, 1], [], []>} : vector<4x8xf32>, vector<8x256xf32>, vector<4x256xf32> -> vector<4x256xf32>
    %c0_7 = arith.constant 0 : index
    %c0_8 = arith.constant 0 : index
    %6 = vector.load %arg4[%c0_7, %c0_8] : memref<4x1xf32, #tpu.memory_space<vmem>>, vector<4x1xf32>
    %7 = vector.broadcast %6 : vector<4x1xf32> to vector<4x256xf32>
    %8 = arith.addf %5, %7 : vector<4x256xf32>
    %c0_9 = arith.constant 0 : index
    %c0_10 = arith.constant 0 : index
    %9 = vector.load %arg5[%c0_9, %c0_10] : memref<12x8xf32, #tpu.memory_space<vmem>>, vector<12x8xf32>
    %cst_11 = arith.constant dense<0.000000e+00> : vector<12x256xf32>
    %10 = tpu.matmul %9, %3, %cst_11 {dimension_numbers = #tpu.dot_dimension_numbers<[1], [0], [0], [1], [0, 0, 1, 1], [], []>} : vector<12x8xf32>, vector<8x256xf32>, vector<12x256xf32> -> vector<12x256xf32>
    %c0_12 = arith.constant 0 : index
    %c0_13 = arith.constant 0 : index
    %11 = vector.load %arg6[%c0_12, %c0_13] : memref<12x1xf32, #tpu.memory_space<vmem>>, vector<12x1xf32>
    %12 = vector.broadcast %11 : vector<12x1xf32> to vector<12x256xf32>
    %13 = arith.addf %10, %12 : vector<12x256xf32>
    %14 = vector.extract_strided_slice %13 {offsets = [0, 0], sizes = [8, 256], strides = [1, 1]} : vector<12x256xf32> to vector<8x256xf32>
    %15 = vector.extract_strided_slice %13 {offsets = [8, 0], sizes = [4, 256], strides = [1, 1]} : vector<12x256xf32> to vector<4x256xf32>
    %c0_14 = arith.constant 0 : index
    %c0_15 = arith.constant 0 : index
    %16 = vector.load %arg7[%c0_14, %c0_15] : memref<8x1xf32, #tpu.memory_space<vmem>>, vector<8x1xf32>
    %17 = vector.extract_strided_slice %14 {offsets = [0, 0], sizes = [8, 128], strides = [1, 1]} : vector<8x256xf32> to vector<8x128xf32>
    %18 = vector.extract_strided_slice %15 {offsets = [0, 0], sizes = [4, 128], strides = [1, 1]} : vector<4x256xf32> to vector<4x128xf32>
    %cst_16 = arith.constant dense<0.000000e+00> : vector<8x4xf32>
    %19 = tpu.matmul %17, %18, %cst_16 {dimension_numbers = #tpu.dot_dimension_numbers<[1], [1], [0], [0], [0, 0, 1, 0], [], []>} : vector<8x128xf32>, vector<4x128xf32>, vector<8x4xf32> -> vector<8x4xf32>
    %20 = vector.extract_strided_slice %8 {offsets = [0, 0], sizes = [4, 128], strides = [1, 1]} : vector<4x256xf32> to vector<4x128xf32>
    %cst_17 = arith.constant dense<0.000000e+00> : vector<8x128xf32>
    %21 = tpu.matmul %19, %20, %cst_17 {dimension_numbers = #tpu.dot_dimension_numbers<[1], [0], [0], [1], [0, 0, 1, 1], [], []>} : vector<8x4xf32>, vector<4x128xf32>, vector<8x128xf32> -> vector<8x128xf32>
    %22 = vector.extract_strided_slice %15 {offsets = [0, 128], sizes = [4, 128], strides = [1, 1]} : vector<4x256xf32> to vector<4x128xf32>
    %cst_18 = arith.constant dense<0.000000e+00> : vector<8x4xf32>
    %23 = tpu.matmul %17, %22, %cst_18 {dimension_numbers = #tpu.dot_dimension_numbers<[1], [1], [0], [0], [0, 0, 1, 0], [], []>} : vector<8x128xf32>, vector<4x128xf32>, vector<8x4xf32> -> vector<8x4xf32>
    %24 = vector.extract_strided_slice %8 {offsets = [0, 128], sizes = [4, 128], strides = [1, 1]} : vector<4x256xf32> to vector<4x128xf32>
    %cst_19 = arith.constant dense<0.000000e+00> : vector<8x128xf32>
    %25 = tpu.matmul %23, %24, %cst_19 {dimension_numbers = #tpu.dot_dimension_numbers<[1], [0], [0], [1], [0, 0, 1, 1], [], []>} : vector<8x4xf32>, vector<4x128xf32>, vector<8x128xf32> -> vector<8x128xf32>
    %26 = arith.addf %21, %25 : vector<8x128xf32>
    %27 = vector.broadcast %16 : vector<8x1xf32> to vector<8x128xf32>
    %28 = arith.addf %26, %27 : vector<8x128xf32>
    %29 = arith.negf %28 : vector<8x128xf32>
    %30 = math.exp %29 : vector<8x128xf32>
    %cst_20 = arith.constant 1.000000e+00 : f32
    %31 = vector.broadcast %cst_20 : f32 to vector<8x128xf32>
    %32 = arith.addf %31, %30 : vector<8x128xf32>
    %33 = arith.divf %31, %32 : vector<8x128xf32>
    %34 = vector.extract_strided_slice %1 {offsets = [0, 0], sizes = [8, 128], strides = [1, 1]} : vector<8x256xf32> to vector<8x128xf32>
    %35 = arith.subf %28, %34 : vector<8x128xf32>
    %36 = arith.mulf %33, %35 : vector<8x128xf32>
    %37 = arith.addf %34, %36 : vector<8x128xf32>
    %c0_21 = arith.constant 0 : index
    %c0_22 = arith.constant 0 : index
    %c0_23 = arith.constant 0 : index
    %38 = vector.load %arg8[%c0_21, %c0_22, %c0_23] : memref<1x8x256xf32, #tpu.memory_space<vmem>>, vector<1x8x128xf32>
    %39 = vector.shape_cast %38 : vector<1x8x128xf32> to vector<8x128xf32>
    %40 = vector.shape_cast %37 : vector<8x128xf32> to vector<1x8x128xf32>
    tpu.vector_store %arg8[%c0_21, %c0_22, %c0_23], %40 {strides = array<i32>} : memref<1x8x256xf32, #tpu.memory_space<vmem>>, vector<1x8x128xf32>,
    %41 = vector.extract_strided_slice %14 {offsets = [0, 128], sizes = [8, 128], strides = [1, 1]} : vector<8x256xf32> to vector<8x128xf32>
    %42 = vector.extract_strided_slice %15 {offsets = [0, 0], sizes = [4, 128], strides = [1, 1]} : vector<4x256xf32> to vector<4x128xf32>
    %cst_24 = arith.constant dense<0.000000e+00> : vector<8x4xf32>
    %43 = tpu.matmul %41, %42, %cst_24 {dimension_numbers = #tpu.dot_dimension_numbers<[1], [1], [0], [0], [0, 0, 1, 0], [], []>} : vector<8x128xf32>, vector<4x128xf32>, vector<8x4xf32> -> vector<8x4xf32>
    %44 = vector.extract_strided_slice %8 {offsets = [0, 0], sizes = [4, 128], strides = [1, 1]} : vector<4x256xf32> to vector<4x128xf32>
    %cst_25 = arith.constant dense<0.000000e+00> : vector<8x128xf32>
    %45 = tpu.matmul %43, %44, %cst_25 {dimension_numbers = #tpu.dot_dimension_numbers<[1], [0], [0], [1], [0, 0, 1, 1], [], []>} : vector<8x4xf32>, vector<4x128xf32>, vector<8x128xf32> -> vector<8x128xf32>
    %46 = vector.extract_strided_slice %15 {offsets = [0, 128], sizes = [4, 128], strides = [1, 1]} : vector<4x256xf32> to vector<4x128xf32>
    %cst_26 = arith.constant dense<0.000000e+00> : vector<8x4xf32>
    %47 = tpu.matmul %41, %46, %cst_26 {dimension_numbers = #tpu.dot_dimension_numbers<[1], [1], [0], [0], [0, 0, 1, 0], [], []>} : vector<8x128xf32>, vector<4x128xf32>, vector<8x4xf32> -> vector<8x4xf32>
    %48 = vector.extract_strided_slice %8 {offsets = [0, 128], sizes = [4, 128], strides = [1, 1]} : vector<4x256xf32> to vector<4x128xf32>
    %cst_27 = arith.constant dense<0.000000e+00> : vector<8x128xf32>
    %49 = tpu.matmul %47, %48, %cst_27 {dimension_numbers = #tpu.dot_dimension_numbers<[1], [0], [0], [1], [0, 0, 1, 1], [], []>} : vector<8x4xf32>, vector<4x128xf32>, vector<8x128xf32> -> vector<8x128xf32>
    %50 = arith.addf %45, %49 : vector<8x128xf32>
    %51 = vector.broadcast %16 : vector<8x1xf32> to vector<8x128xf32>
    %52 = arith.addf %50, %51 : vector<8x128xf32>
    %53 = arith.negf %52 : vector<8x128xf32>
    %54 = math.exp %53 : vector<8x128xf32>
    %cst_28 = arith.constant 1.000000e+00 : f32
    %55 = vector.broadcast %cst_28 : f32 to vector<8x128xf32>
    %56 = arith.addf %55, %54 : vector<8x128xf32>
    %57 = arith.divf %55, %56 : vector<8x128xf32>
    %58 = vector.extract_strided_slice %1 {offsets = [0, 128], sizes = [8, 128], strides = [1, 1]} : vector<8x256xf32> to vector<8x128xf32>
    %59 = arith.subf %52, %58 : vector<8x128xf32>
    %60 = arith.mulf %57, %59 : vector<8x128xf32>
    %61 = arith.addf %58, %60 : vector<8x128xf32>
    %c0_29 = arith.constant 0 : index
    %c0_30 = arith.constant 0 : index
    %c128 = arith.constant 128 : index
    %62 = vector.load %arg8[%c0_29, %c0_30, %c128] : memref<1x8x256xf32, #tpu.memory_space<vmem>>, vector<1x8x128xf32>
    %63 = vector.shape_cast %62 : vector<1x8x128xf32> to vector<8x128xf32>
    %64 = vector.shape_cast %61 : vector<8x128xf32> to vector<1x8x128xf32>
    tpu.vector_store %arg8[%c0_29, %c0_30, %c128], %64 {strides = array<i32>} : memref<1x8x256xf32, #tpu.memory_space<vmem>>, vector<1x8x128xf32>,
    return
  }
  func.func @transform_0(%arg0: i32) -> (i32, i32, i32) {
    %c0_i32 = arith.constant 0 : i32
    %c0_i32_0 = arith.constant 0 : i32
    %c0_i32_1 = arith.constant 0 : i32
    return %arg0, %c0_i32, %c0_i32_0 : i32, i32, i32
  }
  func.func @transform_1(%arg0: i32) -> (i32, i32, i32) {
    %c0_i32 = arith.constant 0 : i32
    %c0_i32_0 = arith.constant 0 : i32
    %c0_i32_1 = arith.constant 0 : i32
    return %arg0, %c0_i32, %c0_i32_0 : i32, i32, i32
  }
  func.func @transform_2(%arg0: i32) -> (i32, i32) {
    %c0_i32 = arith.constant 0 : i32
    %c0_i32_0 = arith.constant 0 : i32
    %c0_i32_1 = arith.constant 0 : i32
    return %c0_i32, %c0_i32_0 : i32, i32
  }
  func.func @transform_3(%arg0: i32) -> (i32, i32) {
    %c0_i32 = arith.constant 0 : i32
    %c0_i32_0 = arith.constant 0 : i32
    %c0_i32_1 = arith.constant 0 : i32
    return %c0_i32, %c0_i32_0 : i32, i32
  }
  func.func @transform_4(%arg0: i32) -> (i32, i32) {
    %c0_i32 = arith.constant 0 : i32
    %c0_i32_0 = arith.constant 0 : i32
    %c0_i32_1 = arith.constant 0 : i32
    return %c0_i32, %c0_i32_0 : i32, i32
  }
  func.func @transform_5(%arg0: i32) -> (i32, i32) {
    %c0_i32 = arith.constant 0 : i32
    %c0_i32_0 = arith.constant 0 : i32
    %c0_i32_1 = arith.constant 0 : i32
    return %c0_i32, %c0_i32_0 : i32, i32
  }
  func.func @transform_6(%arg0: i32) -> (i32, i32) {
    %c0_i32 = arith.constant 0 : i32
    %c0_i32_0 = arith.constant 0 : i32
    %c0_i32_1 = arith.constant 0 : i32
    return %c0_i32, %c0_i32_0 : i32, i32
  }
  func.func @transform_7(%arg0: i32) -> (i32, i32, i32) {
    %c0_i32 = arith.constant 0 : i32
    %c0_i32_0 = arith.constant 0 : i32
    %c0_i32_1 = arith.constant 0 : i32
    return %arg0, %c0_i32, %c0_i32_0 : i32, i32, i32
  }
}

</mosaic_0001>

<llo_original>
// kernel: tpu_custom_call.1
$region0: #{tpu_custom_call.1}
  #allocation0 [shape = 'u32[]', space=smem, size = 0x4, offset = 0x4, fixed_abs, tag = 'smem constant byte address 0x4 - core index']
  #allocation1 [shape = 'u32[144,128]{1,0:T(1,128)}', space=vmem, size = 0x12000, scoped, tag = 'internal scratch']
  %s0 = inlined_call_operand.vmem [shape: f32[2,8,256], index: 0, kind: input, shape index: {}]
  %s1 = inlined_call_operand.hbm [shape: f32[2,8,256], index: 1, kind: input, shape index: {}]
  %s2 = inlined_call_operand.vmem [shape: f32[4,8], index: 2, kind: input, shape index: {}]
  %s3 = inlined_call_operand.vmem [shape: f32[4,1], index: 3, kind: input, shape index: {}]
  %s4 = inlined_call_operand.vmem [shape: f32[12,8], index: 4, kind: input, shape index: {}]
  %s5 = inlined_call_operand.vmem [shape: f32[12,1], index: 5, kind: input, shape index: {}]
  %s6 = inlined_call_operand.vmem [shape: f32[8,1], index: 6, kind: input, shape index: {}]
  %s7 = inlined_call_operand.hbm [shape: f32[2,8,256], index: 7, kind: output, shape index: {}]
  %s8 = sld [smem:[#allocation0]]
  $region65: #{tpu_custom_call.1} parent=0
    _
  %s10 = ssub.s32 1, %s8
  %s11 = scalar_select 0, %s10, %s8
  $region1: #{tpu_custom_call.1} parent=0
    #allocation2 [shape = 'u8[16384]{0}', space=vmem, size = 0x4000, scoped, tag = 'input window, operand 1']
    #allocation3 [shape = 's32[2]{0}', space=sflag, size = 0x8, scoped, tag = 'scoped memory for tpu_custom_call.1']
    #allocation4 [shape = 's32[2]{0}', space=sflag, size = 0x8, scoped, tag = 'scoped memory for tpu_custom_call.1']
    #allocation5 [shape = 'u8[16384]{0}', space=vmem, size = 0x4000, scoped, tag = 'output window, operand 0']
    %12 = vsyncpa [#allocation3], 0
    %s13 = scalar_lea.sflag [#allocation3], 1
    %14 = vsyncpa %s13, 0
    %15 = vsyncpa [#allocation4], 0
    %s16 = scalar_lea.sflag [#allocation4], 1
    %17 = vsyncpa %s16, 0
    loop: start=0, step=1, limit=4
    $region2: #{tpu_custom_call.1} parent=1 // loop_pre_header
      _
    $region3: #{tpu_custom_call.1} parent=1 // loop_header
      %s19 = sphi 0, %s23
      %p20 = scmp.ge.s32.totalorder %s19, 4
      %s29 = sphi 0, %s31
      %s32 = sphi 0, %s29
      %s33 = sphi 0, %s32
      %s49 = sphi 0, %s33
      %s55 = sphi 0, %s57
      %s58 = sphi 0, %s55
      %s59 = sphi 0, %s58
      %s75 = sphi 0, %s59
      %s79 = sphi 0, %s79
      %s81 = sphi 0, %s79
      %s82 = sphi 0, %s81
      %s96 = sphi 0, %s82
      %s100 = sphi 0, %s100
      %s102 = sphi 0, %s100
      %s103 = sphi 0, %s102
      %s117 = sphi 0, %s103
      %s121 = sphi 0, %s121
      %s123 = sphi 0, %s121
      %s124 = sphi 0, %s123
      %s138 = sphi 0, %s124
      %s142 = sphi 0, %s142
      %s144 = sphi 0, %s142
      %s145 = sphi 0, %s144
      %s159 = sphi 0, %s145
      %s163 = sphi 0, %s163
      %s165 = sphi 0, %s163
      %s166 = sphi 0, %s165
      %s180 = sphi 0, %s166
      %s186 = sphi 0, %s188
      %s189 = sphi 0, %s186
      %s190 = sphi 0, %s189
      %s206 = sphi 0, %s190
    $region4: #{tpu_custom_call.1} parent=1 // loop_header_branch
      %22 = sbr.rel (%p20) target = $region8
    $region5: #{tpu_custom_call.1} parent=1 // loop_body
      %s24 = ssub.s32 %s19, 1
      %s25 = ssub.s32 %s19, 2
      %s26 = sadd.s32 %s19, 1
      %s27 = ssub.s32 %s19, %s26
      %p28 = scmp.eq.s32.totalorder %s27, 0
      %s30 = sadd.s32 %s29, 1
      %s31 = scalar_select %p28, %s29, %s30
      %p34 = pneg %p28
      %p35 = scmp.eq.s32.totalorder %s19, 1
      %p36 = por %p34, %p35
      %p37 = scmp.ne.s32.totalorder %s29, %s32
      %p38 = scmp.eq.s32.totalorder %s19, 0
      %p39 = por %p37, %p38
      %p40 = scmp.ne.s32.totalorder %s29, %s32
      %p41 = scmp.eq.s32.totalorder %s24, 1
      %p42 = por %p40, %p41
      %p43 = scmp.ne.s32.totalorder %s32, %s33
      %p44 = scmp.eq.s32.totalorder %s24, 0
      %p45 = por %p43, %p44
      %p46 = scmp.ne.s32.totalorder %s32, %s33
      %p47 = scmp.eq.s32.totalorder %s25, 1
      %p48 = por %p46, %p47
      %p50 = scmp.ne.s32.totalorder %s33, %s49
      %p51 = scmp.eq.s32.totalorder %s25, 0
      %p52 = por %p50, %p51
      %s53 = ssub.s32 %s19, %s26
      %p54 = scmp.eq.s32.totalorder %s53, 0
      %s56 = sadd.s32 %s55, 1
      %s57 = scalar_select %p54, %s55, %s56
      %p60 = pneg %p54
      %p61 = scmp.eq.s32.totalorder %s19, 1
      %p62 = por %p60, %p61
      %p63 = scmp.ne.s32.totalorder %s55, %s58
      %p64 = scmp.eq.s32.totalorder %s19, 0
      %p65 = por %p63, %p64
      %p66 = scmp.ne.s32.totalorder %s55, %s58
      %p67 = scmp.eq.s32.totalorder %s24, 1
      %p68 = por %p66, %p67
      %p69 = scmp.ne.s32.totalorder %s58, %s59
      %p70 = scmp.eq.s32.totalorder %s24, 0
      %p71 = por %p69, %p70
      %p72 = scmp.ne.s32.totalorder %s58, %s59
      %p73 = scmp.eq.s32.totalorder %s25, 1
      %p74 = por %p72, %p73
      %p76 = scmp.ne.s32.totalorder %s59, %s75
      %p77 = scmp.eq.s32.totalorder %s25, 0
      %p78 = por %p76, %p77
      %s80 = sadd.s32 %s79, 1
      %p83 = scmp.eq.s32.totalorder %s19, 1
      %p84 = scmp.ne.s32.totalorder %s79, %s81
      %p85 = scmp.eq.s32.totalorder %s19, 0
      %p86 = por %p84, %p85
      %p87 = scmp.ne.s32.totalorder %s79, %s81
      %p88 = scmp.eq.s32.totalorder %s24, 1
      %p89 = por %p87, %p88
      %p90 = scmp.ne.s32.totalorder %s81, %s82
      %p91 = scmp.eq.s32.totalorder %s24, 0
      %p92 = por %p90, %p91
      %p93 = scmp.ne.s32.totalorder %s81, %s82
      %p94 = scmp.eq.s32.totalorder %s25, 1
      %p95 = por %p93, %p94
      %p97 = scmp.ne.s32.totalorder %s82, %s96
      %p98 = scmp.eq.s32.totalorder %s25, 0
      %p99 = por %p97, %p98
      %s101 = sadd.s32 %s100, 1
      %p104 = scmp.eq.s32.totalorder %s19, 1
      %p105 = scmp.ne.s32.totalorder %s100, %s102
      %p106 = scmp.eq.s32.totalorder %s19, 0
      %p107 = por %p105, %p106
      %p108 = scmp.ne.s32.totalorder %s100, %s102
      %p109 = scmp.eq.s32.totalorder %s24, 1
      %p110 = por %p108, %p109
      %p111 = scmp.ne.s32.totalorder %s102, %s103
      %p112 = scmp.eq.s32.totalorder %s24, 0
      %p113 = por %p111, %p112
      %p114 = scmp.ne.s32.totalorder %s102, %s103
      %p115 = scmp.eq.s32.totalorder %s25, 1
      %p116 = por %p114, %p115
      %p118 = scmp.ne.s32.totalorder %s103, %s117
      %p119 = scmp.eq.s32.totalorder %s25, 0
      %p120 = por %p118, %p119
      %s122 = sadd.s32 %s121, 1
      %p125 = scmp.eq.s32.totalorder %s19, 1
      %p126 = scmp.ne.s32.totalorder %s121, %s123
      %p127 = scmp.eq.s32.totalorder %s19, 0
      %p128 = por %p126, %p127
      %p129 = scmp.ne.s32.totalorder %s121, %s123
      %p130 = scmp.eq.s32.totalorder %s24, 1
      %p131 = por %p129, %p130
      %p132 = scmp.ne.s32.totalorder %s123, %s124
      %p133 = scmp.eq.s32.totalorder %s24, 0
      %p134 = por %p132, %p133
      %p135 = scmp.ne.s32.totalorder %s123, %s124
      %p136 = scmp.eq.s32.totalorder %s25, 1
      %p137 = por %p135, %p136
      %p139 = scmp.ne.s32.totalorder %s124, %s138
      %p140 = scmp.eq.s32.totalorder %s25, 0
      %p141 = por %p139, %p140
      %s143 = sadd.s32 %s142, 1
      %p146 = scmp.eq.s32.totalorder %s19, 1
      %p147 = scmp.ne.s32.totalorder %s142, %s144
      %p148 = scmp.eq.s32.totalorder %s19, 0
      %p149 = por %p147, %p148
      %p150 = scmp.ne.s32.totalorder %s142, %s144
      %p151 = scmp.eq.s32.totalorder %s24, 1
      %p152 = por %p150, %p151
      %p153 = scmp.ne.s32.totalorder %s144, %s145
      %p154 = scmp.eq.s32.totalorder %s24, 0
      %p155 = por %p153, %p154
      %p156 = scmp.ne.s32.totalorder %s144, %s145
      %p157 = scmp.eq.s32.totalorder %s25, 1
      %p158 = por %p156, %p157
      %p160 = scmp.ne.s32.totalorder %s145, %s159
      %p161 = scmp.eq.s32.totalorder %s25, 0
      %p162 = por %p160, %p161
      %s164 = sadd.s32 %s163, 1
      %p167 = scmp.eq.s32.totalorder %s19, 1
      %p168 = scmp.ne.s32.totalorder %s163, %s165
      %p169 = scmp.eq.s32.totalorder %s19, 0
      %p170 = por %p168, %p169
      %p171 = scmp.ne.s32.totalorder %s163, %s165
      %p172 = scmp.eq.s32.totalorder %s24, 1
      %p173 = por %p171, %p172
      %p174 = scmp.ne.s32.totalorder %s165, %s166
      %p175 = scmp.eq.s32.totalorder %s24, 0
      %p176 = por %p174, %p175
      %p177 = scmp.ne.s32.totalorder %s165, %s166
      %p178 = scmp.eq.s32.totalorder %s25, 1
      %p179 = por %p177, %p178
      %p181 = scmp.ne.s32.totalorder %s166, %s180
      %p182 = scmp.eq.s32.totalorder %s25, 0
      %p183 = por %p181, %p182
      %s184 = ssub.s32 %s19, %s26
      %p185 = scmp.eq.s32.totalorder %s184, 0
      %s187 = sadd.s32 %s186, 1
      %s188 = scalar_select %p185, %s186, %s187
      %p191 = pneg %p185
      %p192 = scmp.eq.s32.totalorder %s19, 1
      %p193 = por %p191, %p192
      %p194 = scmp.ne.s32.totalorder %s186, %s189
      %p195 = scmp.eq.s32.totalorder %s19, 0
      %p196 = por %p194, %p195
      %p197 = scmp.ne.s32.totalorder %s186, %s189
      %p198 = scmp.eq.s32.totalorder %s24, 1
      %p199 = por %p197, %p198
      %p200 = scmp.ne.s32.totalorder %s189, %s190
      %p201 = scmp.eq.s32.totalorder %s24, 0
      %p202 = por %p200, %p201
      %p203 = scmp.ne.s32.totalorder %s189, %s190
      %p204 = scmp.eq.s32.totalorder %s25, 1
      %p205 = por %p203, %p204
      %p207 = scmp.ne.s32.totalorder %s190, %s206
      %p208 = scmp.eq.s32.totalorder %s25, 0
      %p209 = por %p207, %p208
      %p210 = scmp.le.s32.totalorder 1, %s19
      %p211 = scmp.lt.s32.totalorder %s19, 3
      %p212 = pnand %p210, %p211
      %p213 = pneg %p212
      // Predicated region
      $region9: #{tpu_custom_call.1} parent=5 // pred_check
        _
      $region10: #{tpu_custom_call.1} parent=5 // pred_check_branch
        %215 = sbr.rel (%p212) target = $region12
      $region11: #{tpu_custom_call.1} parent=5 // pred_region
        %s216 = ssub.s32 %s19, 1
        // Predicated region
        $region13: #{tpu_custom_call.1} parent=11 // pred_check
          %p217 = pneg %p92
        $region14: #{tpu_custom_call.1} parent=11 // pred_check_branch
          %219 = sbr.rel (%p217) target = $region16
        $region15: #{tpu_custom_call.1} parent=11 // pred_region
          _
        $region16: #{tpu_custom_call.1} parent=11 // pred_fallthru
          _
        // Predicated region
        $region17: #{tpu_custom_call.1} parent=11 // pred_check
          %p220 = pneg %p113
        $region18: #{tpu_custom_call.1} parent=11 // pred_check_branch
          %222 = sbr.rel (%p220) target = $region20
        $region19: #{tpu_custom_call.1} parent=11 // pred_region
          _
        $region20: #{tpu_custom_call.1} parent=11 // pred_fallthru
          _
        // Predicated region
        $region21: #{tpu_custom_call.1} parent=11 // pred_check
          %p223 = pneg %p134
        $region22: #{tpu_custom_call.1} parent=11 // pred_check_branch
          %225 = sbr.rel (%p223) target = $region24
        $region23: #{tpu_custom_call.1} parent=11 // pred_region
          _
        $region24: #{tpu_custom_call.1} parent=11 // pred_fallthru
          _
        // Predicated region
        $region25: #{tpu_custom_call.1} parent=11 // pred_check
          %p226 = pneg %p155
        $region26: #{tpu_custom_call.1} parent=11 // pred_check_branch
          %228 = sbr.rel (%p226) target = $region28
        $region27: #{tpu_custom_call.1} parent=11 // pred_region
          _
        $region28: #{tpu_custom_call.1} parent=11 // pred_fallthru
          _
        // Predicated region
        $region29: #{tpu_custom_call.1} parent=11 // pred_check
          %p229 = pneg %p176
        $region30: #{tpu_custom_call.1} parent=11 // pred_check_branch
          %231 = sbr.rel (%p229) target = $region32
        $region31: #{tpu_custom_call.1} parent=11 // pred_region
          _
        $region32: #{tpu_custom_call.1} parent=11 // pred_fallthru
          _
      $region12: #{tpu_custom_call.1} parent=5 // pred_fallthru
        _
      %p232 = scmp.lt.s32.totalorder %s19, 2
      // Predicated region
      $region33: #{tpu_custom_call.1} parent=5 // pred_check
        %p233 = pneg %p232
      $region34: #{tpu_custom_call.1} parent=5 // pred_check_branch
        %235 = sbr.rel (%p233) target = $region36
      $region35: #{tpu_custom_call.1} parent=5 // pred_region
        // Predicated region
        $region37: #{tpu_custom_call.1} parent=35 // pred_check
          %p236 = pneg %p39
        $region38: #{tpu_custom_call.1} parent=35 // pred_check_branch
          %238 = sbr.rel (%p236) target = $region40
        $region39: #{tpu_custom_call.1} parent=35 // pred_region
          %p239 = scmp.lt.s32.totalorder %s19, 1
          %s240 = scalar_select %p239, %s19, 1
          %s241 = smul.addr %s240, 2
          %s242 = smul.addr %s241, 8
          %s243 = scalar_lea.vmem %s0, %s242
        $region40: #{tpu_custom_call.1} parent=35 // pred_fallthru
          _
        // Predicated region
        $region41: #{tpu_custom_call.1} parent=35 // pred_check
          %p244 = pneg %p65
        $region42: #{tpu_custom_call.1} parent=35 // pred_check_branch
          %246 = sbr.rel (%p244) target = $region44
        $region43: #{tpu_custom_call.1} parent=35 // pred_region
          %s247 = sand.u32 %s55, 1
          %s248 = scalar_lea.sflag [#allocation3], %s247
          %s249 = sand.u32 %s55, 1
          %s250 = smul.addr %s249, 16
          %s251 = scalar_lea.vmem [#allocation2], %s250
          %s253 = ssub.s32 256, 256
          %254 = vsyncadd %s248, %s253
          %s255 = smul.addr %s19, 2
          %s256 = smul.addr %s255, 128
          %s257 = scalar_lea.hbm %s1, %s256
          %s259 = sshll.u32 %s251, 4
          %s260 = int_to_ptr.vmem [resolvable:$true] %s259
          %262 = dma.hbm_to_vmem [thread:$0]  %s257, 256, %s260, %s248
        $region44: #{tpu_custom_call.1} parent=35 // pred_fallthru
          _
      $region36: #{tpu_custom_call.1} parent=5 // pred_fallthru
        _
      %p263 = scmp.le.s32.totalorder 1, %s19
      %p264 = scmp.lt.s32.totalorder %s19, 3
      %p265 = pnand %p263, %p264
      %p266 = pneg %p265
      // Predicated region
      $region45: #{tpu_custom_call.1} parent=5 // pred_check
        _
      $region46: #{tpu_custom_call.1} parent=5 // pred_check_branch
        %268 = sbr.rel (%p265) target = $region48
      $region47: #{tpu_custom_call.1} parent=5 // pred_region
        %s269 = ssub.s32 %s19, 1
        %s270 = sand.u32 %s58, 1
        %s271 = scalar_lea.sflag [#allocation3], %s270
        %s272 = sand.u32 %s58, 1
        %s273 = smul.addr %s272, 16
        %s274 = scalar_lea.vmem [#allocation2], %s273
        // Predicated region
        $region49: #{tpu_custom_call.1} parent=47 // pred_check
          %p275 = pneg %p71
        $region50: #{tpu_custom_call.1} parent=47 // pred_check_branch
          %277 = sbr.rel (%p275) target = $region52
        $region51: #{tpu_custom_call.1} parent=47 // pred_region
          %278 = dma.done %s271, 256
        $region52: #{tpu_custom_call.1} parent=47 // pred_fallthru
          _
        %p279 = scmp.lt.s32.totalorder %s24, 1
        %s280 = scalar_select %p279, %s24, 1
        %s281 = smul.addr %s280, 2
        %s282 = smul.addr %s281, 8
        %s283 = scalar_lea.vmem %s0, %s282
        %p284 = pneg %p45
        %p285 = pneg %p42
        %s286 = sand.u32 %s58, 1
        %s287 = scalar_lea.sflag [#allocation3], %s286
        %s288 = sand.u32 %s58, 1
        %s289 = smul.addr %s288, 16
        %s290 = scalar_lea.vmem [#allocation2], %s289
        %p291 = pneg %p71
        %p292 = pneg %p68
        %p293 = pneg %p92
        %p294 = pneg %p89
        %p295 = pneg %p113
        %p296 = pneg %p110
        %p297 = pneg %p134
        %p298 = pneg %p131
        %p299 = pneg %p155
        %p300 = pneg %p152
        %p301 = pneg %p176
        %p302 = pneg %p173
        %p303 = pneg %p202
        %p304 = pneg %p199
        %s305 = sand.u32 %s189, 1
        %s306 = scalar_lea.sflag [#allocation4], %s305
        %s307 = sand.u32 %s189, 1
        %s308 = smul.addr %s307, 16
        %s309 = scalar_lea.vmem [#allocation5], %s308
        %p310 = scmp.lt.s32.totalorder %s24, 1
        %s311 = scalar_select %p310, %s24, 1
        %s312 = smul.addr %s311, 2
        %s313 = smul.addr %s312, 8
        %s314 = scalar_lea.vmem %s0, %s313
        %v315 = vld [vmem:[%s314] sm:$0xff]
        %v316 = vld [vmem:[%s314 + $0x8] sm:$0xff]
        %v317 = vld [vmem:[%s274] sm:$0xff]
        %v318 = vld [vmem:[%s274 + $0x8] sm:$0xff]
        %v319 = vld [vmem:[%s2] sm:$0xf]
        %v320 = vld [vmem:[%s3] sm:$0xf]
        %322 = vset.pattern.permute.xlu0 0
        %323 = vperm.xlu0 %322, %v320
        %v324 = vpop.permute.xlu0 %323
        %vm326 = vcmask 64512
        %v328 = vsel %vm326, %v319, 0
        %330 = vmatprep.subr.mxu0 %v316
        %331 = vmatpush1.msra.mxu0 %v315
        %332 = vmatprep.subr.mxu0 0.0
        %333 = vmatpush1.msra.mxu0 0.0
        %334 = vmatprep.subr.mxu0 0.0
        %335 = vmatpush1.msra.mxu0 0.0
        %336 = vmatprep.subr.mxu0 0.0
        %337 = vmatpush1.msra.mxu0 0.0
        %338 = vmatprep.subr.mxu0 0.0
        %339 = vmatpush1.msra.mxu0 0.0
        %340 = vmatprep.subr.mxu0 0.0
        %341 = vmatpush1.msra.mxu0 0.0
        %342 = vmatprep.subr.mxu0 0.0
        %343 = vmatpush1.msra.mxu0 0.0
        %344 = vmatprep.subr.mxu0 0.0
        %345 = vmatpush1.msra.mxu0 0.0
        %346 = vmatprep.subr.mxu0 0.0
        %347 = vmatpush1.msra.mxu0 0.0
        %348 = vmatprep.subr.mxu0 0.0
        %349 = vmatpush1.msra.mxu0 0.0
        %350 = vmatprep.subr.mxu0 0.0
        %351 = vmatpush1.msra.mxu0 0.0
        %352 = vmatprep.subr.mxu0 0.0
        %353 = vmatpush1.msra.mxu0 0.0
        %354 = vmatprep.subr.mxu0 0.0
        %355 = vmatpush1.msra.mxu0 0.0
        %356 = vmatprep.subr.mxu0 0.0
        %357 = vmatpush1.msra.mxu0 0.0
        %358 = vmatprep.subr.mxu0 0.0
        %359 = vmatpush1.msra.mxu0 0.0
        %360 = vmatprep.subr.mxu0 0.0
        %361 = vmatpush1.msra.mxu0 0.0
        %362 = vmatprep.subr.mxu0 0.0
        %363 = vmatpush1.msra.mxu0 0.0
        %364 = vmatprep.subr.mxu0 0.0
        %365 = vmatpush1.msra.mxu0 0.0
        %366 = vmatprep.subr.mxu0 0.0
        %367 = vmatpush1.msra.mxu0 0.0
        %368 = vmatprep.subr.mxu0 0.0
        %369 = vmatpush1.msra.mxu0 0.0
        %370 = vmatprep.subr.mxu0 0.0
        %371 = vmatpush1.msra.mxu0 0.0
        %372 = vmatprep.subr.mxu0 0.0
        %373 = vmatpush1.msra.mxu0 0.0
        %374 = vmatprep.subr.mxu0 0.0
        %375 = vmatpush1.msra.mxu0 0.0
        %376 = vmatprep.subr.mxu0 0.0
        %377 = vmatpush1.msra.mxu0 0.0
        %378 = vmatprep.subr.mxu0 0.0
        %379 = vmatpush1.msra.mxu0 0.0
        %380 = vmatprep.subr.mxu0 0.0
        %381 = vmatpush1.msra.mxu0 0.0
        %382 = vmatprep.subr.mxu0 0.0
        %383 = vmatpush1.msra.mxu0 0.0
        %384 = vmatprep.subr.mxu0 0.0
        %385 = vmatpush1.msra.mxu0 0.0
        %386 = vmatprep.subr.mxu0 0.0
        %387 = vmatpush1.msra.mxu0 0.0
        %388 = vmatprep.subr.mxu0 0.0
        %389 = vmatpush1.msra.mxu0 0.0
        %390 = vmatprep.subr.mxu0 0.0
        %391 = vmatpush1.msra.mxu0 0.0
        %392 = vmatprep.subr.mxu0 0.0
        %393 = vmatpush1.msra.mxu0 0.0
        %394 = vmatprep.mubr.f32.mxu0 0.0
        %395 = vmatmul.mubr.f32.gmra.mrb[0].mxu0 %v328
        %v396 = vpop.f32.mrb[0].mxu0
        %v397 = vadd.f32 %v324, %v396
        %v398 = vpop.f32.mrb[0].mxu0
        %v399 = vadd.f32 %v324, %v398
        %400 = vdwg.mxu0
        %v401 = vld [vmem:[%s4] sm:$0xff]
        %v402 = vld [vmem:[%s4 + $0x8] sm:$0xf]
        %v403 = vld [vmem:[%s5] sm:$0xff]
        %v404 = vld [vmem:[%s5 + $0x8] sm:$0xf]
        %406 = vset.pattern.permute.xlu0 0
        %407 = vperm.xlu0 %406, %v403
        %v408 = vpop.permute.xlu0 %407
        %411 = vset.pattern.permute.xlu0 0
        %412 = vperm.xlu0 %411, %v404
        %v413 = vpop.permute.xlu0 %412
        %v416 = vsel %vm326, %v401, 0
        %v419 = vsel %vm326, %v402, 0
        %421 = vmatprep.subr.mxu0 %v318
        %422 = vmatpush1.msra.mxu0 %v317
        %423 = vmatprep.subr.mxu0 0.0
        %424 = vmatpush1.msra.mxu0 0.0
        %425 = vmatprep.subr.mxu0 0.0
        %426 = vmatpush1.msra.mxu0 0.0
        %427 = vmatprep.subr.mxu0 0.0
        %428 = vmatpush1.msra.mxu0 0.0
        %429 = vmatprep.subr.mxu0 0.0
        %430 = vmatpush1.msra.mxu0 0.0
        %431 = vmatprep.subr.mxu0 0.0
        %432 = vmatpush1.msra.mxu0 0.0
        %433 = vmatprep.subr.mxu0 0.0
        %434 = vmatpush1.msra.mxu0 0.0
        %435 = vmatprep.subr.mxu0 0.0
        %436 = vmatpush1.msra.mxu0 0.0
        %437 = vmatprep.subr.mxu0 0.0
        %438 = vmatpush1.msra.mxu0 0.0
        %439 = vmatprep.subr.mxu0 0.0
        %440 = vmatpush1.msra.mxu0 0.0
        %441 = vmatprep.subr.mxu0 0.0
        %442 = vmatpush1.msra.mxu0 0.0
        %443 = vmatprep.subr.mxu0 0.0
        %444 = vmatpush1.msra.mxu0 0.0
        %445 = vmatprep.subr.mxu0 0.0
        %446 = vmatpush1.msra.mxu0 0.0
        %447 = vmatprep.subr.mxu0 0.0
        %448 = vmatpush1.msra.mxu0 0.0
        %449 = vmatprep.subr.mxu0 0.0
        %450 = vmatpush1.msra.mxu0 0.0
        %451 = vmatprep.subr.mxu0 0.0
        %452 = vmatpush1.msra.mxu0 0.0
        %453 = vmatprep.subr.mxu0 0.0
        %454 = vmatpush1.msra.mxu0 0.0
        %455 = vmatprep.subr.mxu0 0.0
        %456 = vmatpush1.msra.mxu0 0.0
        %457 = vmatprep.subr.mxu0 0.0
        %458 = vmatpush1.msra.mxu0 0.0
        %459 = vmatprep.subr.mxu0 0.0
        %460 = vmatpush1.msra.mxu0 0.0
        %461 = vmatprep.subr.mxu0 0.0
        %462 = vmatpush1.msra.mxu0 0.0
        %463 = vmatprep.subr.mxu0 0.0
        %464 = vmatpush1.msra.mxu0 0.0
        %465 = vmatprep.subr.mxu0 0.0
        %466 = vmatpush1.msra.mxu0 0.0
        %467 = vmatprep.subr.mxu0 0.0
        %468 = vmatpush1.msra.mxu0 0.0
        %469 = vmatprep.subr.mxu0 0.0
        %470 = vmatpush1.msra.mxu0 0.0
        %471 = vmatprep.subr.mxu0 0.0
        %472 = vmatpush1.msra.mxu0 0.0
        %473 = vmatprep.subr.mxu0 0.0
        %474 = vmatpush1.msra.mxu0 0.0
        %475 = vmatprep.subr.mxu0 0.0
        %476 = vmatpush1.msra.mxu0 0.0
        %477 = vmatprep.subr.mxu0 0.0
        %478 = vmatpush1.msra.mxu0 0.0
        %479 = vmatprep.subr.mxu0 0.0
        %480 = vmatpush1.msra.mxu0 0.0
        %481 = vmatprep.subr.mxu0 0.0
        %482 = vmatpush1.msra.mxu0 0.0
        %483 = vmatprep.subr.mxu0 0.0
        %484 = vmatpush1.msra.mxu0 0.0
        %485 = vmatprep.mubr.f32.mxu0 0.0
        %486 = vmatmul.mubr.f32.gmra.mrb[0].mxu0 %v416
        %v487 = vpop.f32.mrb[0].mxu0
        %v488 = vadd.f32 %v408, %v487
        %v489 = vpop.f32.mrb[0].mxu0
        %v490 = vadd.f32 %v408, %v489
        %491 = vmatprep.mubr.f32.mxu0 0.0
        %492 = vmatmul.mubr.f32.gmra.mrb[0].mxu0 %v419
        %v493 = vpop.f32.mrb[0].mxu0
        %v494 = vadd.f32 %v413, %v493
        %v495 = vpop.f32.mrb[0].mxu0
        %v496 = vadd.f32 %v413, %v495
        %497 = vdwg.mxu0
        %v498 = vld [vmem:[%s6] sm:$0xff]
        %499 = vmatprep.subr.mxu0 0.0
        %500 = vmatpush1.xpose.msra.mxu0 %v494
        %501 = vmatprep.subr.mxu0 0.0
        %502 = vmatpush1.xpose.msra.mxu0 0.0
        %503 = vmatprep.subr.mxu0 0.0
        %504 = vmatpush1.xpose.msra.mxu0 0.0
        %505 = vmatprep.subr.mxu0 0.0
        %506 = vmatpush1.xpose.msra.mxu0 0.0
        %507 = vmatprep.subr.mxu0 0.0
        %508 = vmatpush1.xpose.msra.mxu0 0.0
        %509 = vmatprep.subr.mxu0 0.0
        %510 = vmatpush1.xpose.msra.mxu0 0.0
        %511 = vmatprep.subr.mxu0 0.0
        %512 = vmatpush1.xpose.msra.mxu0 0.0
        %513 = vmatprep.subr.mxu0 0.0
        %514 = vmatpush1.xpose.msra.mxu0 0.0
        %515 = vmatprep.subr.mxu0 0.0
        %516 = vmatpush1.xpose.msra.mxu0 0.0
        %517 = vmatprep.subr.mxu0 0.0
        %518 = vmatpush1.xpose.msra.mxu0 0.0
        %519 = vmatprep.subr.mxu0 0.0
        %520 = vmatpush1.xpose.msra.mxu0 0.0
        %521 = vmatprep.subr.mxu0 0.0
        %522 = vmatpush1.xpose.msra.mxu0 0.0
        %523 = vmatprep.subr.mxu0 0.0
        %524 = vmatpush1.xpose.msra.mxu0 0.0
        %525 = vmatprep.subr.mxu0 0.0
        %526 = vmatpush1.xpose.msra.mxu0 0.0
        %527 = vmatprep.subr.mxu0 0.0
        %528 = vmatpush1.xpose.msra.mxu0 0.0
        %529 = vmatprep.subr.mxu0 0.0
        %530 = vmatpush1.xpose.msra.mxu0 0.0
        %531 = vmatprep.subr.mxu0 0.0
        %532 = vmatpush1.xpose.msra.mxu0 0.0
        %533 = vmatprep.subr.mxu0 0.0
        %534 = vmatpush1.xpose.msra.mxu0 0.0
        %535 = vmatprep.subr.mxu0 0.0
        %536 = vmatpush1.xpose.msra.mxu0 0.0
        %537 = vmatprep.subr.mxu0 0.0
        %538 = vmatpush1.xpose.msra.mxu0 0.0
        %539 = vmatprep.subr.mxu0 0.0
        %540 = vmatpush1.xpose.msra.mxu0 0.0
        %541 = vmatprep.subr.mxu0 0.0
        %542 = vmatpush1.xpose.msra.mxu0 0.0
        %543 = vmatprep.subr.mxu0 0.0
        %544 = vmatpush1.xpose.msra.mxu0 0.0
        %545 = vmatprep.subr.mxu0 0.0
        %546 = vmatpush1.xpose.msra.mxu0 0.0
        %547 = vmatprep.subr.mxu0 0.0
        %548 = vmatpush1.xpose.msra.mxu0 0.0
        %549 = vmatprep.subr.mxu0 0.0
        %550 = vmatpush1.xpose.msra.mxu0 0.0
        %551 = vmatprep.subr.mxu0 0.0
        %552 = vmatpush1.xpose.msra.mxu0 0.0
        %553 = vmatprep.subr.mxu0 0.0
        %554 = vmatpush1.xpose.msra.mxu0 0.0
        %555 = vmatprep.subr.mxu0 0.0
        %556 = vmatpush1.xpose.msra.mxu0 0.0
        %557 = vmatprep.subr.mxu0 0.0
        %558 = vmatpush1.xpose.msra.mxu0 0.0
        %559 = vmatprep.subr.mxu0 0.0
        %560 = vmatpush1.xpose.msra.mxu0 0.0
        %561 = vmatprep.subr.mxu0 0.0
        %562 = vmatpush1.xpose.msra.mxu0 0.0
        %563 = vmatprep.mubr.f32.mxu0 0.0
        %564 = vmatmul.mubr.f32.gmra.mrb[0].mxu0 %v488
        %v565 = vpop.f32.mrb[0].mxu0
        %v566 = vadd.f32 0.0, %v565
        %v567 = vpop.f32.mrb[0].mxu0
        %568 = vdwg.mxu0
        %569 = vmatprep.subr.mxu0 0.0
        %570 = vmatpush1.xpose.msra.mxu0 %v496
        %571 = vmatprep.subr.mxu0 0.0
        %572 = vmatpush1.xpose.msra.mxu0 0.0
        %573 = vmatprep.subr.mxu0 0.0
        %574 = vmatpush1.xpose.msra.mxu0 0.0
        %575 = vmatprep.subr.mxu0 0.0
        %576 = vmatpush1.xpose.msra.mxu0 0.0
        %577 = vmatprep.subr.mxu0 0.0
        %578 = vmatpush1.xpose.msra.mxu0 0.0
        %579 = vmatprep.subr.mxu0 0.0
        %580 = vmatpush1.xpose.msra.mxu0 0.0
        %581 = vmatprep.subr.mxu0 0.0
        %582 = vmatpush1.xpose.msra.mxu0 0.0
        %583 = vmatprep.subr.mxu0 0.0
        %584 = vmatpush1.xpose.msra.mxu0 0.0
        %585 = vmatprep.subr.mxu0 0.0
        %586 = vmatpush1.xpose.msra.mxu0 0.0
        %587 = vmatprep.subr.mxu0 0.0
        %588 = vmatpush1.xpose.msra.mxu0 0.0
        %589 = vmatprep.subr.mxu0 0.0
        %590 = vmatpush1.xpose.msra.mxu0 0.0
        %591 = vmatprep.subr.mxu0 0.0
        %592 = vmatpush1.xpose.msra.mxu0 0.0
        %593 = vmatprep.subr.mxu0 0.0
        %594 = vmatpush1.xpose.msra.mxu0 0.0
        %595 = vmatprep.subr.mxu0 0.0
        %596 = vmatpush1.xpose.msra.mxu0 0.0
        %597 = vmatprep.subr.mxu0 0.0
        %598 = vmatpush1.xpose.msra.mxu0 0.0
        %599 = vmatprep.subr.mxu0 0.0
        %600 = vmatpush1.xpose.msra.mxu0 0.0
        %601 = vmatprep.subr.mxu0 0.0
        %602 = vmatpush1.xpose.msra.mxu0 0.0
        %603 = vmatprep.subr.mxu0 0.0
        %604 = vmatpush1.xpose.msra.mxu0 0.0
        %605 = vmatprep.subr.mxu0 0.0
        %606 = vmatpush1.xpose.msra.mxu0 0.0
        %607 = vmatprep.subr.mxu0 0.0
        %608 = vmatpush1.xpose.msra.mxu0 0.0
        %609 = vmatprep.subr.mxu0 0.0
        %610 = vmatpush1.xpose.msra.mxu0 0.0
        %611 = vmatprep.subr.mxu0 0.0
        %612 = vmatpush1.xpose.msra.mxu0 0.0
        %613 = vmatprep.subr.mxu0 0.0
        %614 = vmatpush1.xpose.msra.mxu0 0.0
        %615 = vmatprep.subr.mxu0 0.0
        %616 = vmatpush1.xpose.msra.mxu0 0.0
        %617 = vmatprep.subr.mxu0 0.0
        %618 = vmatpush1.xpose.msra.mxu0 0.0
        %619 = vmatprep.subr.mxu0 0.0
        %620 = vmatpush1.xpose.msra.mxu0 0.0
        %621 = vmatprep.subr.mxu0 0.0
        %622 = vmatpush1.xpose.msra.mxu0 0.0
        %623 = vmatprep.subr.mxu0 0.0
        %624 = vmatpush1.xpose.msra.mxu0 0.0
        %625 = vmatprep.subr.mxu0 0.0
        %626 = vmatpush1.xpose.msra.mxu0 0.0
        %627 = vmatprep.subr.mxu0 0.0
        %628 = vmatpush1.xpose.msra.mxu0 0.0
        %629 = vmatprep.subr.mxu0 0.0
        %630 = vmatpush1.xpose.msra.mxu0 0.0
        %631 = vmatprep.subr.mxu0 0.0
        %632 = vmatpush1.xpose.msra.mxu0 0.0
        %633 = vmatprep.mubr.f32.mxu0 0.0
        %634 = vmatmul.mubr.f32.gmra.mrb[0].mxu0 %v488
        %v635 = vpop.f32.mrb[0].mxu0
        %v636 = vadd.f32 0.0, %v635
        %v637 = vpop.f32.mrb[0].mxu0
        %638 = vdwg.mxu0
        %vm639 = vcmask 31744
        %v641 = vsel %vm639, %v636, 0
        %vm643 = vcmask 1043456
        %v645 = vsel %vm643, %v399, 0
        %647 = vmatprep.subr.mxu0 0.0
        %648 = vmatpush1.msra.mxu0 %v645
        %649 = vmatprep.subr.mxu0 0.0
        %650 = vmatpush1.msra.mxu0 0.0
        %651 = vmatprep.subr.mxu0 0.0
        %652 = vmatpush1.msra.mxu0 0.0
        %653 = vmatprep.subr.mxu0 0.0
        %654 = vmatpush1.msra.mxu0 0.0
        %655 = vmatprep.subr.mxu0 0.0
        %656 = vmatpush1.msra.mxu0 0.0
        %657 = vmatprep.subr.mxu0 0.0
        %658 = vmatpush1.msra.mxu0 0.0
        %659 = vmatprep.subr.mxu0 0.0
        %660 = vmatpush1.msra.mxu0 0.0
        %661 = vmatprep.subr.mxu0 0.0
        %662 = vmatpush1.msra.mxu0 0.0
        %663 = vmatprep.subr.mxu0 0.0
        %664 = vmatpush1.msra.mxu0 0.0
        %665 = vmatprep.subr.mxu0 0.0
        %666 = vmatpush1.msra.mxu0 0.0
        %667 = vmatprep.subr.mxu0 0.0
        %668 = vmatpush1.msra.mxu0 0.0
        %669 = vmatprep.subr.mxu0 0.0
        %670 = vmatpush1.msra.mxu0 0.0
        %671 = vmatprep.subr.mxu0 0.0
        %672 = vmatpush1.msra.mxu0 0.0
        %673 = vmatprep.subr.mxu0 0.0
        %674 = vmatpush1.msra.mxu0 0.0
        %675 = vmatprep.subr.mxu0 0.0
        %676 = vmatpush1.msra.mxu0 0.0
        %677 = vmatprep.subr.mxu0 0.0
        %678 = vmatpush1.msra.mxu0 0.0
        %679 = vmatprep.subr.mxu0 0.0
        %680 = vmatpush1.msra.mxu0 0.0
        %681 = vmatprep.subr.mxu0 0.0
        %682 = vmatpush1.msra.mxu0 0.0
        %683 = vmatprep.subr.mxu0 0.0
        %684 = vmatpush1.msra.mxu0 0.0
        %685 = vmatprep.subr.mxu0 0.0
        %686 = vmatpush1.msra.mxu0 0.0
        %687 = vmatprep.subr.mxu0 0.0
        %688 = vmatpush1.msra.mxu0 0.0
        %689 = vmatprep.subr.mxu0 0.0
        %690 = vmatpush1.msra.mxu0 0.0
        %691 = vmatprep.subr.mxu0 0.0
        %692 = vmatpush1.msra.mxu0 0.0
        %693 = vmatprep.subr.mxu0 0.0
        %694 = vmatpush1.msra.mxu0 0.0
        %695 = vmatprep.subr.mxu0 0.0
        %696 = vmatpush1.msra.mxu0 0.0
        %697 = vmatprep.subr.mxu0 0.0
        %698 = vmatpush1.msra.mxu0 0.0
        %699 = vmatprep.subr.mxu0 0.0
        %700 = vmatpush1.msra.mxu0 0.0
        %701 = vmatprep.subr.mxu0 0.0
        %702 = vmatpush1.msra.mxu0 0.0
        %703 = vmatprep.subr.mxu0 0.0
        %704 = vmatpush1.msra.mxu0 0.0
        %705 = vmatprep.subr.mxu0 0.0
        %706 = vmatpush1.msra.mxu0 0.0
        %707 = vmatprep.subr.mxu0 0.0
        %708 = vmatpush1.msra.mxu0 0.0
        %709 = vmatprep.subr.mxu0 0.0
        %710 = vmatpush1.msra.mxu0 0.0
        %711 = vmatprep.mubr.f32.mxu0 0.0
        %712 = vmatmul.mubr.f32.gmra.mrb[0].mxu0 %v641
        %v713 = vpop.f32.mrb[0].mxu0
        %v714 = vadd.f32 0.0, %v713
        %v715 = vpop.f32.mrb[0].mxu0
        %716 = vdwg.mxu0
        %v718 = vsel %vm639, %v566, 0
        %v721 = vsel %vm643, %v397, 0
        %723 = vmatprep.subr.mxu0 0.0
        %724 = vmatpush1.msra.mxu0 %v721
        %725 = vmatprep.subr.mxu0 0.0
        %726 = vmatpush1.msra.mxu0 0.0
        %727 = vmatprep.subr.mxu0 0.0
        %728 = vmatpush1.msra.mxu0 0.0
        %729 = vmatprep.subr.mxu0 0.0
        %730 = vmatpush1.msra.mxu0 0.0
        %731 = vmatprep.subr.mxu0 0.0
        %732 = vmatpush1.msra.mxu0 0.0
        %733 = vmatprep.subr.mxu0 0.0
        %734 = vmatpush1.msra.mxu0 0.0
        %735 = vmatprep.subr.mxu0 0.0
        %736 = vmatpush1.msra.mxu0 0.0
        %737 = vmatprep.subr.mxu0 0.0
        %738 = vmatpush1.msra.mxu0 0.0
        %739 = vmatprep.subr.mxu0 0.0
        %740 = vmatpush1.msra.mxu0 0.0
        %741 = vmatprep.subr.mxu0 0.0
        %742 = vmatpush1.msra.mxu0 0.0
        %743 = vmatprep.subr.mxu0 0.0
        %744 = vmatpush1.msra.mxu0 0.0
        %745 = vmatprep.subr.mxu0 0.0
        %746 = vmatpush1.msra.mxu0 0.0
        %747 = vmatprep.subr.mxu0 0.0
        %748 = vmatpush1.msra.mxu0 0.0
        %749 = vmatprep.subr.mxu0 0.0
        %750 = vmatpush1.msra.mxu0 0.0
        %751 = vmatprep.subr.mxu0 0.0
        %752 = vmatpush1.msra.mxu0 0.0
        %753 = vmatprep.subr.mxu0 0.0
        %754 = vmatpush1.msra.mxu0 0.0
        %755 = vmatprep.subr.mxu0 0.0
        %756 = vmatpush1.msra.mxu0 0.0
        %757 = vmatprep.subr.mxu0 0.0
        %758 = vmatpush1.msra.mxu0 0.0
        %759 = vmatprep.subr.mxu0 0.0
        %760 = vmatpush1.msra.mxu0 0.0
        %761 = vmatprep.subr.mxu0 0.0
        %762 = vmatpush1.msra.mxu0 0.0
        %763 = vmatprep.subr.mxu0 0.0
        %764 = vmatpush1.msra.mxu0 0.0
        %765 = vmatprep.subr.mxu0 0.0
        %766 = vmatpush1.msra.mxu0 0.0
        %767 = vmatprep.subr.mxu0 0.0
        %768 = vmatpush1.msra.mxu0 0.0
        %769 = vmatprep.subr.mxu0 0.0
        %770 = vmatpush1.msra.mxu0 0.0
        %771 = vmatprep.subr.mxu0 0.0
        %772 = vmatpush1.msra.mxu0 0.0
        %773 = vmatprep.subr.mxu0 0.0
        %774 = vmatpush1.msra.mxu0 0.0
        %775 = vmatprep.subr.mxu0 0.0
        %776 = vmatpush1.msra.mxu0 0.0
        %777 = vmatprep.subr.mxu0 0.0
        %778 = vmatpush1.msra.mxu0 0.0
        %779 = vmatprep.subr.mxu0 0.0
        %780 = vmatpush1.msra.mxu0 0.0
        %781 = vmatprep.subr.mxu0 0.0
        %782 = vmatpush1.msra.mxu0 0.0
        %783 = vmatprep.subr.mxu0 0.0
        %784 = vmatpush1.msra.mxu0 0.0
        %785 = vmatprep.subr.mxu0 0.0
        %786 = vmatpush1.msra.mxu0 0.0
        %787 = vmatprep.mubr.f32.mxu0 0.0
        %788 = vmatmul.mubr.f32.gmra.mrb[0].mxu0 %v718
        %v789 = vpop.f32.mrb[0].mxu0
        %v790 = vadd.f32 %v714, %v789
        %v791 = vpop.f32.mrb[0].mxu0
        %792 = vdwg.mxu0
        %794 = vset.pattern.permute.xlu0 0
        %795 = vperm.xlu0 %794, %v498
        %v796 = vpop.permute.xlu0 %795
        %v798 = vadd.f32 %v790, %v796
        %v799 = vxor.u32 %v798, 2147483648
        %v800 = vmul.f32 %v799, 1.442695
        %v801 = vpow.pop %v800
        %v802 = vadd.f32 %v801, 1.0
        %v803 = vrcp.pop %v802
        %v804 = vmul.f32 1.0, %v803
        %v805 = vsub.f32 %v798, %v315
        %v806 = vmul.f32 %v804, %v805
        %v807 = vadd.f32 %v315, %v806
        %808 = vst [vmem:[%s309] sm:$0xff] %v807
        %809 = vmatprep.subr.mxu0 0.0
        %810 = vmatpush1.xpose.msra.mxu0 %v494
        %811 = vmatprep.subr.mxu0 0.0
        %812 = vmatpush1.xpose.msra.mxu0 0.0
        %813 = vmatprep.subr.mxu0 0.0
        %814 = vmatpush1.xpose.msra.mxu0 0.0
        %815 = vmatprep.subr.mxu0 0.0
        %816 = vmatpush1.xpose.msra.mxu0 0.0
        %817 = vmatprep.subr.mxu0 0.0
        %818 = vmatpush1.xpose.msra.mxu0 0.0
        %819 = vmatprep.subr.mxu0 0.0
        %820 = vmatpush1.xpose.msra.mxu0 0.0
        %821 = vmatprep.subr.mxu0 0.0
        %822 = vmatpush1.xpose.msra.mxu0 0.0
        %823 = vmatprep.subr.mxu0 0.0
        %824 = vmatpush1.xpose.msra.mxu0 0.0
        %825 = vmatprep.subr.mxu0 0.0
        %826 = vmatpush1.xpose.msra.mxu0 0.0
        %827 = vmatprep.subr.mxu0 0.0
        %828 = vmatpush1.xpose.msra.mxu0 0.0
        %829 = vmatprep.subr.mxu0 0.0
        %830 = vmatpush1.xpose.msra.mxu0 0.0
        %831 = vmatprep.subr.mxu0 0.0
        %832 = vmatpush1.xpose.msra.mxu0 0.0
        %833 = vmatprep.subr.mxu0 0.0
        %834 = vmatpush1.xpose.msra.mxu0 0.0
        %835 = vmatprep.subr.mxu0 0.0
        %836 = vmatpush1.xpose.msra.mxu0 0.0
        %837 = vmatprep.subr.mxu0 0.0
        %838 = vmatpush1.xpose.msra.mxu0 0.0
        %839 = vmatprep.subr.mxu0 0.0
        %840 = vmatpush1.xpose.msra.mxu0 0.0
        %841 = vmatprep.subr.mxu0 0.0
        %842 = vmatpush1.xpose.msra.mxu0 0.0
        %843 = vmatprep.subr.mxu0 0.0
        %844 = vmatpush1.xpose.msra.mxu0 0.0
        %845 = vmatprep.subr.mxu0 0.0
        %846 = vmatpush1.xpose.msra.mxu0 0.0
        %847 = vmatprep.subr.mxu0 0.0
        %848 = vmatpush1.xpose.msra.mxu0 0.0
        %849 = vmatprep.subr.mxu0 0.0
        %850 = vmatpush1.xpose.msra.mxu0 0.0
        %851 = vmatprep.subr.mxu0 0.0
        %852 = vmatpush1.xpose.msra.mxu0 0.0
        %853 = vmatprep.subr.mxu0 0.0
        %854 = vmatpush1.xpose.msra.mxu0 0.0
        %855 = vmatprep.subr.mxu0 0.0
        %856 = vmatpush1.xpose.msra.mxu0 0.0
        %857 = vmatprep.subr.mxu0 0.0
        %858 = vmatpush1.xpose.msra.mxu0 0.0
        %859 = vmatprep.subr.mxu0 0.0
        %860 = vmatpush1.xpose.msra.mxu0 0.0
        %861 = vmatprep.subr.mxu0 0.0
        %862 = vmatpush1.xpose.msra.mxu0 0.0
        %863 = vmatprep.subr.mxu0 0.0
        %864 = vmatpush1.xpose.msra.mxu0 0.0
        %865 = vmatprep.subr.mxu0 0.0
        %866 = vmatpush1.xpose.msra.mxu0 0.0
        %867 = vmatprep.subr.mxu0 0.0
        %868 = vmatpush1.xpose.msra.mxu0 0.0
        %869 = vmatprep.subr.mxu0 0.0
        %870 = vmatpush1.xpose.msra.mxu0 0.0
        %871 = vmatprep.subr.mxu0 0.0
        %872 = vmatpush1.xpose.msra.mxu0 0.0
        %873 = vmatprep.mubr.f32.mxu0 0.0
        %874 = vmatmul.mubr.f32.gmra.mrb[0].mxu0 %v490
        %v875 = vpop.f32.mrb[0].mxu0
        %v876 = vadd.f32 0.0, %v875
        %v877 = vpop.f32.mrb[0].mxu0
        %878 = vdwg.mxu0
        %879 = vmatprep.subr.mxu0 0.0
        %880 = vmatpush1.xpose.msra.mxu0 %v496
        %881 = vmatprep.subr.mxu0 0.0
        %882 = vmatpush1.xpose.msra.mxu0 0.0
        %883 = vmatprep.subr.mxu0 0.0
        %884 = vmatpush1.xpose.msra.mxu0 0.0
        %885 = vmatprep.subr.mxu0 0.0
        %886 = vmatpush1.xpose.msra.mxu0 0.0
        %887 = vmatprep.subr.mxu0 0.0
        %888 = vmatpush1.xpose.msra.mxu0 0.0
        %889 = vmatprep.subr.mxu0 0.0
        %890 = vmatpush1.xpose.msra.mxu0 0.0
        %891 = vmatprep.subr.mxu0 0.0
        %892 = vmatpush1.xpose.msra.mxu0 0.0
        %893 = vmatprep.subr.mxu0 0.0
        %894 = vmatpush1.xpose.msra.mxu0 0.0
        %895 = vmatprep.subr.mxu0 0.0
        %896 = vmatpush1.xpose.msra.mxu0 0.0
        %897 = vmatprep.subr.mxu0 0.0
        %898 = vmatpush1.xpose.msra.mxu0 0.0
        %899 = vmatprep.subr.mxu0 0.0
        %900 = vmatpush1.xpose.msra.mxu0 0.0
        %901 = vmatprep.subr.mxu0 0.0
        %902 = vmatpush1.xpose.msra.mxu0 0.0
        %903 = vmatprep.subr.mxu0 0.0
        %904 = vmatpush1.xpose.msra.mxu0 0.0
        %905 = vmatprep.subr.mxu0 0.0
        %906 = vmatpush1.xpose.msra.mxu0 0.0
        %907 = vmatprep.subr.mxu0 0.0
        %908 = vmatpush1.xpose.msra.mxu0 0.0
        %909 = vmatprep.subr.mxu0 0.0
        %910 = vmatpush1.xpose.msra.mxu0 0.0
        %911 = vmatprep.subr.mxu0 0.0
        %912 = vmatpush1.xpose.msra.mxu0 0.0
        %913 = vmatprep.subr.mxu0 0.0
        %914 = vmatpush1.xpose.msra.mxu0 0.0
        %915 = vmatprep.subr.mxu0 0.0
        %916 = vmatpush1.xpose.msra.mxu0 0.0
        %917 = vmatprep.subr.mxu0 0.0
        %918 = vmatpush1.xpose.msra.mxu0 0.0
        %919 = vmatprep.subr.mxu0 0.0
        %920 = vmatpush1.xpose.msra.mxu0 0.0
        %921 = vmatprep.subr.mxu0 0.0
        %922 = vmatpush1.xpose.msra.mxu0 0.0
        %923 = vmatprep.subr.mxu0 0.0
        %924 = vmatpush1.xpose.msra.mxu0 0.0
        %925 = vmatprep.subr.mxu0 0.0
        %926 = vmatpush1.xpose.msra.mxu0 0.0
        %927 = vmatprep.subr.mxu0 0.0
        %928 = vmatpush1.xpose.msra.mxu0 0.0
        %929 = vmatprep.subr.mxu0 0.0
        %930 = vmatpush1.xpose.msra.mxu0 0.0
        %931 = vmatprep.subr.mxu0 0.0
        %932 = vmatpush1.xpose.msra.mxu0 0.0
        %933 = vmatprep.subr.mxu0 0.0
        %934 = vmatpush1.xpose.msra.mxu0 0.0
        %935 = vmatprep.subr.mxu0 0.0
        %936 = vmatpush1.xpose.msra.mxu0 0.0
        %937 = vmatprep.subr.mxu0 0.0
        %938 = vmatpush1.xpose.msra.mxu0 0.0
        %939 = vmatprep.subr.mxu0 0.0
        %940 = vmatpush1.xpose.msra.mxu0 0.0
        %941 = vmatprep.subr.mxu0 0.0
        %942 = vmatpush1.xpose.msra.mxu0 0.0
        %943 = vmatprep.mubr.f32.mxu0 0.0
        %944 = vmatmul.mubr.f32.gmra.mrb[0].mxu0 %v490
        %v945 = vpop.f32.mrb[0].mxu0
        %v946 = vadd.f32 0.0, %v945
        %v947 = vpop.f32.mrb[0].mxu0
        %948 = vdwg.mxu0
        %v950 = vsel %vm639, %v946, 0
        %952 = vmatprep.subr.mxu0 0.0
        %953 = vmatpush1.msra.mxu0 %v645
        %954 = vmatprep.subr.mxu0 0.0
        %955 = vmatpush1.msra.mxu0 0.0
        %956 = vmatprep.subr.mxu0 0.0
        %957 = vmatpush1.msra.mxu0 0.0
        %958 = vmatprep.subr.mxu0 0.0
        %959 = vmatpush1.msra.mxu0 0.0
        %960 = vmatprep.subr.mxu0 0.0
        %961 = vmatpush1.msra.mxu0 0.0
        %962 = vmatprep.subr.mxu0 0.0
        %963 = vmatpush1.msra.mxu0 0.0
        %964 = vmatprep.subr.mxu0 0.0
        %965 = vmatpush1.msra.mxu0 0.0
        %966 = vmatprep.subr.mxu0 0.0
        %967 = vmatpush1.msra.mxu0 0.0
        %968 = vmatprep.subr.mxu0 0.0
        %969 = vmatpush1.msra.mxu0 0.0
        %970 = vmatprep.subr.mxu0 0.0
        %971 = vmatpush1.msra.mxu0 0.0
        %972 = vmatprep.subr.mxu0 0.0
        %973 = vmatpush1.msra.mxu0 0.0
        %974 = vmatprep.subr.mxu0 0.0
        %975 = vmatpush1.msra.mxu0 0.0
        %976 = vmatprep.subr.mxu0 0.0
        %977 = vmatpush1.msra.mxu0 0.0
        %978 = vmatprep.subr.mxu0 0.0
        %979 = vmatpush1.msra.mxu0 0.0
        %980 = vmatprep.subr.mxu0 0.0
        %981 = vmatpush1.msra.mxu0 0.0
        %982 = vmatprep.subr.mxu0 0.0
        %983 = vmatpush1.msra.mxu0 0.0
        %984 = vmatprep.subr.mxu0 0.0
        %985 = vmatpush1.msra.mxu0 0.0
        %986 = vmatprep.subr.mxu0 0.0
        %987 = vmatpush1.msra.mxu0 0.0
        %988 = vmatprep.subr.mxu0 0.0
        %989 = vmatpush1.msra.mxu0 0.0
        %990 = vmatprep.subr.mxu0 0.0
        %991 = vmatpush1.msra.mxu0 0.0
        %992 = vmatprep.subr.mxu0 0.0
        %993 = vmatpush1.msra.mxu0 0.0
        %994 = vmatprep.subr.mxu0 0.0
        %995 = vmatpush1.msra.mxu0 0.0
        %996 = vmatprep.subr.mxu0 0.0
        %997 = vmatpush1.msra.mxu0 0.0
        %998 = vmatprep.subr.mxu0 0.0
        %999 = vmatpush1.msra.mxu0 0.0
        %1000 = vmatprep.subr.mxu0 0.0
        %1001 = vmatpush1.msra.mxu0 0.0
        %1002 = vmatprep.subr.mxu0 0.0
        %1003 = vmatpush1.msra.mxu0 0.0
        %1004 = vmatprep.subr.mxu0 0.0
        %1005 = vmatpush1.msra.mxu0 0.0
        %1006 = vmatprep.subr.mxu0 0.0
        %1007 = vmatpush1.msra.mxu0 0.0
        %1008 = vmatprep.subr.mxu0 0.0
        %1009 = vmatpush1.msra.mxu0 0.0
        %1010 = vmatprep.subr.mxu0 0.0
        %1011 = vmatpush1.msra.mxu0 0.0
        %1012 = vmatprep.subr.mxu0 0.0
        %1013 = vmatpush1.msra.mxu0 0.0
        %1014 = vmatprep.subr.mxu0 0.0
        %1015 = vmatpush1.msra.mxu0 0.0
        %1016 = vmatprep.mubr.f32.mxu0 0.0
        %1017 = vmatmul.mubr.f32.gmra.mrb[0].mxu0 %v950
        %v1018 = vpop.f32.mrb[0].mxu0
        %v1019 = vadd.f32 0.0, %v1018
        %v1020 = vpop.f32.mrb[0].mxu0
        %1021 = vdwg.mxu0
        %v1023 = vsel %vm639, %v876, 0
        %1025 = vmatprep.subr.mxu0 0.0
        %1026 = vmatpush1.msra.mxu0 %v721
        %1027 = vmatprep.subr.mxu0 0.0
        %1028 = vmatpush1.msra.mxu0 0.0
        %1029 = vmatprep.subr.mxu0 0.0
        %1030 = vmatpush1.msra.mxu0 0.0
        %1031 = vmatprep.subr.mxu0 0.0
        %1032 = vmatpush1.msra.mxu0 0.0
        %1033 = vmatprep.subr.mxu0 0.0
        %1034 = vmatpush1.msra.mxu0 0.0
        %1035 = vmatprep.subr.mxu0 0.0
        %1036 = vmatpush1.msra.mxu0 0.0
        %1037 = vmatprep.subr.mxu0 0.0
        %1038 = vmatpush1.msra.mxu0 0.0
        %1039 = vmatprep.subr.mxu0 0.0
        %1040 = vmatpush1.msra.mxu0 0.0
        %1041 = vmatprep.subr.mxu0 0.0
        %1042 = vmatpush1.msra.mxu0 0.0
        %1043 = vmatprep.subr.mxu0 0.0
        %1044 = vmatpush1.msra.mxu0 0.0
        %1045 = vmatprep.subr.mxu0 0.0
        %1046 = vmatpush1.msra.mxu0 0.0
        %1047 = vmatprep.subr.mxu0 0.0
        %1048 = vmatpush1.msra.mxu0 0.0
        %1049 = vmatprep.subr.mxu0 0.0
        %1050 = vmatpush1.msra.mxu0 0.0
        %1051 = vmatprep.subr.mxu0 0.0
        %1052 = vmatpush1.msra.mxu0 0.0
        %1053 = vmatprep.subr.mxu0 0.0
        %1054 = vmatpush1.msra.mxu0 0.0
        %1055 = vmatprep.subr.mxu0 0.0
        %1056 = vmatpush1.msra.mxu0 0.0
        %1057 = vmatprep.subr.mxu0 0.0
        %1058 = vmatpush1.msra.mxu0 0.0
        %1059 = vmatprep.subr.mxu0 0.0
        %1060 = vmatpush1.msra.mxu0 0.0
        %1061 = vmatprep.subr.mxu0 0.0
        %1062 = vmatpush1.msra.mxu0 0.0
        %1063 = vmatprep.subr.mxu0 0.0
        %1064 = vmatpush1.msra.mxu0 0.0
        %1065 = vmatprep.subr.mxu0 0.0
        %1066 = vmatpush1.msra.mxu0 0.0
        %1067 = vmatprep.subr.mxu0 0.0
        %1068 = vmatpush1.msra.mxu0 0.0
        %1069 = vmatprep.subr.mxu0 0.0
        %1070 = vmatpush1.msra.mxu0 0.0
        %1071 = vmatprep.subr.mxu0 0.0
        %1072 = vmatpush1.msra.mxu0 0.0
        %1073 = vmatprep.subr.mxu0 0.0
        %1074 = vmatpush1.msra.mxu0 0.0
        %1075 = vmatprep.subr.mxu0 0.0
        %1076 = vmatpush1.msra.mxu0 0.0
        %1077 = vmatprep.subr.mxu0 0.0
        %1078 = vmatpush1.msra.mxu0 0.0
        %1079 = vmatprep.subr.mxu0 0.0
        %1080 = vmatpush1.msra.mxu0 0.0
        %1081 = vmatprep.subr.mxu0 0.0
        %1082 = vmatpush1.msra.mxu0 0.0
        %1083 = vmatprep.subr.mxu0 0.0
        %1084 = vmatpush1.msra.mxu0 0.0
        %1085 = vmatprep.subr.mxu0 0.0
        %1086 = vmatpush1.msra.mxu0 0.0
        %1087 = vmatprep.subr.mxu0 0.0
        %1088 = vmatpush1.msra.mxu0 0.0
        %1089 = vmatprep.mubr.f32.mxu0 0.0
        %1090 = vmatmul.mubr.f32.gmra.mrb[0].mxu0 %v1023
        %v1091 = vpop.f32.mrb[0].mxu0
        %v1092 = vadd.f32 %v1019, %v1091
        %v1093 = vpop.f32.mrb[0].mxu0
        %1094 = vdwg.mxu0
        %v1095 = vadd.f32 %v1092, %v796
        %v1096 = vxor.u32 %v1095, 2147483648
        %v1097 = vmul.f32 %v1096, 1.442695
        %v1098 = vpow.pop %v1097
        %v1099 = vadd.f32 %v1098, 1.0
        %v1100 = vrcp.pop %v1099
        %v1101 = vmul.f32 1.0, %v1100
        %v1102 = vsub.f32 %v1095, %v316
        %v1103 = vmul.f32 %v1101, %v1102
        %v1104 = vadd.f32 %v316, %v1103
        %1105 = vst [vmem:[%s309 + $0x8] sm:$0xff] %v1104
        %s1106 = sand.u32 %s189, 1
        %s1107 = scalar_lea.sflag [#allocation4], %s1106
        %s1108 = sand.u32 %s189, 1
        %s1109 = smul.addr %s1108, 16
        %s1110 = scalar_lea.vmem [#allocation5], %s1109
        // Predicated region
        $region53: #{tpu_custom_call.1} parent=47 // pred_check
          %p1111 = pneg %p199
        $region54: #{tpu_custom_call.1} parent=47 // pred_check_branch
          %1113 = sbr.rel (%p1111) target = $region56
        $region55: #{tpu_custom_call.1} parent=47 // pred_region
          %s1115 = ssub.s32 256, 256
          %1116 = vsyncadd %s1107, %s1115
          %s1117 = smul.addr %s24, 2
          %s1118 = smul.addr %s1117, 128
          %s1119 = scalar_lea.hbm %s7, %s1118
          %s1121 = sshll.u32 %s1110, 4
          %s1122 = int_to_ptr.vmem [resolvable:$true] %s1121
          %1124 = dma.vmem_to_hbm [thread:$0]  %s1122, 256, %s1119, %s1107
        $region56: #{tpu_custom_call.1} parent=47 // pred_fallthru
          _
      $region48: #{tpu_custom_call.1} parent=5 // pred_fallthru
        _
      %p1125 = scmp.le.s32.totalorder 2, %s19
      // Predicated region
      $region57: #{tpu_custom_call.1} parent=5 // pred_check
        %p1126 = pneg %p1125
      $region58: #{tpu_custom_call.1} parent=5 // pred_check_branch
        %1128 = sbr.rel (%p1126) target = $region60
      $region59: #{tpu_custom_call.1} parent=5 // pred_region
        %s1129 = ssub.s32 %s19, 2
        // Predicated region
        $region61: #{tpu_custom_call.1} parent=59 // pred_check
          %p1130 = pneg %p205
        $region62: #{tpu_custom_call.1} parent=59 // pred_check_branch
          %1132 = sbr.rel (%p1130) target = $region64
        $region63: #{tpu_custom_call.1} parent=59 // pred_region
          %s1133 = sand.u32 %s190, 1
          %s1134 = scalar_lea.sflag [#allocation4], %s1133
          %s1135 = sand.u32 %s190, 1
          %s1136 = smul.addr %s1135, 16
          %s1137 = scalar_lea.vmem [#allocation5], %s1136
          %1138 = dma.done %s1134, 256
        $region64: #{tpu_custom_call.1} parent=59 // pred_fallthru
          _
      $region60: #{tpu_custom_call.1} parent=5 // pred_fallthru
        _
    $region6: #{tpu_custom_call.1} parent=1 // loop_footer
      %s23 = sadd.s32 1, %s19
    $region7: #{tpu_custom_call.1} parent=1 // loop_footer_branch
      %18 = sbr.rel target = $region3
    $region8: #{tpu_custom_call.1} parent=1 // loop_exit
      _
    %1139 = vsyncpa [#allocation3], 1
    %s1140 = scalar_lea.sflag [#allocation3], 1
    %1141 = vsyncpa %s1140, 1
    %1142 = vsyncpa [#allocation4], 1
    %s1143 = scalar_lea.sflag [#allocation4], 1
    %1144 = vsyncpa %s1143, 1

</llo_original>
